<compile_context>
chip_gen: v7x
topology: tpu7x:2x2x1
jax: 0.10.0
libtpu: 0.0.40
codegen_flags: <defaults>
</compile_context>

<pallas_src>
import jax
import jax.numpy as jnp
from jax import lax
from jax.experimental import pallas as pl
from jax.experimental.pallas import tpu as pltpu


def self_attention_kernel(x_ref, w_ref, b_ref, gamma_ref,
                          o_ref, q_scr, k_scr, v_scr):
    """One (batch, query-tile) grid step.

    Lane-dense (C, N) layout: channels on sublanes, spatial positions on lanes.
      x_ref    : (1, C, N)      f32   full feature map of this batch element
      w_ref    : (2*Ck+C, C)    bf16  fused [Wq; Wk; Wv]
      b_ref    : (2*Ck+C, 1)    f32   fused [bq; bk; bv]
      gamma_ref: (1,)           f32   in SMEM
      o_ref    : (1, C, TQ)     f32   query-tile slice of the output
      q/k/v_scr: bf16 VMEM scratch with the fused projections, computed once per
                 batch element (at query-tile 0) and reused across query tiles.
    """
    qi = pl.program_id(1)
    tq = o_ref.shape[2]
    ck = q_scr.shape[0]

    # Fused QKV projection: one MXU matmul (contraction depth C), once per batch elem.
    @pl.when(qi == 0)
    def _():
        x_bf = x_ref[0].astype(jnp.bfloat16)                         # (C, N)
        qkv = jnp.dot(w_ref[...], x_bf,
                      preferred_element_type=jnp.float32)            # (2Ck+C, N) f32
        qkv = qkv + b_ref[...]
        q_scr[...] = qkv[0:ck].astype(jnp.bfloat16)
        k_scr[...] = qkv[ck:2 * ck].astype(jnp.bfloat16)
        v_scr[...] = qkv[2 * ck:].astype(jnp.bfloat16)

    start = pl.multiple_of(qi * tq, tq)
    q_tile = q_scr[:, pl.ds(start, tq)]                              # (Ck, TQ) bf16

    # energy[i, j] = q[:, i] . k[:, j]  -- contract Ck directly, no explicit transpose.
    energy = lax.dot_general(
        q_tile, k_scr[...],
        dimension_numbers=(((0,), (0,)), ((), ())),
        preferred_element_type=jnp.float32)                          # (TQ, N) f32

    # Row softmax in f32 (exact over the full key axis).
    m = jnp.max(energy, axis=-1, keepdims=True)
    p = jnp.exp(energy - m)
    attn = p * pl.reciprocal(jnp.sum(p, axis=-1, keepdims=True), approx=True)

    # out[c, i] = sum_j value[c, j] * attention[i, j]
    out = lax.dot_general(
        v_scr[...], attn.astype(jnp.bfloat16),
        dimension_numbers=(((1,), (1,)), ((), ())),
        preferred_element_type=jnp.float32)                          # (C, TQ) f32

    gamma = gamma_ref[0]
    x_q = x_ref[0, :, pl.ds(start, tq)]                              # (C, TQ) f32
    o_ref[0] = (gamma * out + x_q).astype(o_ref.dtype)


def self_attention_pallas(x_nchw, wq, wk, wv, bq, bk, bv, gamma):
    """x_nchw: (B, C, W, H) f32. PyTorch 1x1-conv weights squeezed:
       wq, wk: (Ck, C); wv: (C, C); biases (Ck,)/(Ck,)/(C,); gamma scalar."""
    B, C, W, H = x_nchw.shape
    N = W * H
    Ck = wq.shape[0]
    Ctot = 2 * Ck + C

    # Lane-dense (B, C, N): a pure reshape of NCHW -- no transpose, no extra HBM pass.
    x_bcn = x_nchw.reshape(B, C, N).astype(jnp.float32)

    # Fused QKV weights (bf16 MXU operands) and fused bias column (f32).
    w_qkv = jnp.concatenate([wq, wk, wv], axis=0).astype(jnp.bfloat16)       # (Ctot, C)
    b_qkv = jnp.concatenate([bq, bk, bv], axis=0).reshape(Ctot, 1).astype(jnp.float32)
    gamma_s = jnp.asarray(gamma, jnp.float32).reshape(1)                     # SMEM scalar

    # Query-row tile: lane-aligned (128) when possible, otherwise the whole row axis.
    if N % 128 == 0 and N > 128:
        tq = 128
    else:
        tq = N
    nq = N // tq

    out_bcn = pl.pallas_call(
        self_attention_kernel,
        out_shape=jax.ShapeDtypeStruct((B, C, N), jnp.float32),
        grid_spec=pltpu.PrefetchScalarGridSpec(
            num_scalar_prefetch=0,
            grid=(B, nq),
            in_specs=[
                pl.BlockSpec((1, C, N), lambda b, qi: (b, 0, 0)),            # x
                pl.BlockSpec((Ctot, C), lambda b, qi: (0, 0)),               # fused W
                pl.BlockSpec((Ctot, 1), lambda b, qi: (0, 0)),               # fused bias
                pl.BlockSpec(memory_space=pltpu.MemorySpace.SMEM),           # gamma
            ],
            out_specs=pl.BlockSpec((1, C, tq), lambda b, qi: (b, 0, qi)),
            scratch_shapes=[
                pltpu.VMEM((Ck, N), jnp.bfloat16),    # q
                pltpu.VMEM((Ck, N), jnp.bfloat16),    # k
                pltpu.VMEM((C, N), jnp.bfloat16),     # v
            ],
        ),
        compiler_params=pltpu.CompilerParams(
            dimension_semantics=("parallel", "arbitrary")),
    )(x_bcn, w_qkv, b_qkv, gamma_s)

    # (B, C, N) -> (B, C, W, H): pure reshape, no transpose.
    return out_bcn.reshape(B, C, W, H)


def self_attention_ref(x_nchw, wq, wk, wv, bq, bk, bv, gamma):
    """Pure-JAX f32 reference mirroring the PyTorch forward exactly."""
    B, C, W, H = x_nchw.shape
    N = W * H
    xf = x_nchw.reshape(B, C, N)                               # (B, C, N)
    q = jnp.einsum('oc,bcn->bon', wq, xf) + bq[None, :, None]  # (B, Ck, N)
    k = jnp.einsum('oc,bcn->bon', wk, xf) + bk[None, :, None]
    v = jnp.einsum('oc,bcn->bon', wv, xf) + bv[None, :, None]  # (B, C, N)
    query = jnp.transpose(q, (0, 2, 1))                        # (B, N, Ck)
    energy = jnp.einsum('bnk,bkm->bnm', query, k)              # (B, N, N)
    attn = jax.nn.softmax(energy, axis=-1)
    out = jnp.einsum('bcn,bmn->bcm', v, attn)                  # value @ attention.T
    out = out.reshape(B, C, W, H)
    return gamma * out + x_nchw


if __name__ == "__main__":
    key = jax.random.PRNGKey(0)
    B, C, W, H = 2, 32, 16, 16      # in_dim = 32 -> Ck = 4; N = W*H = 256
    Ck = C // 8

    k0, k1, k2, k3, k4, k5, k6 = jax.random.split(key, 7)
    x = jax.random.normal(k0, (B, C, W, H), dtype=jnp.float32)

    # Conv2d(kernel_size=1) weights, squeezed to (out_ch, in_ch)
    wq = 0.1 * jax.random.normal(k1, (Ck, C), dtype=jnp.float32)
    wk = 0.1 * jax.random.normal(k2, (Ck, C), dtype=jnp.float32)
    wv = 0.1 * jax.random.normal(k3, (C, C), dtype=jnp.float32)
    bq = 0.1 * jax.random.normal(k4, (Ck,), dtype=jnp.float32)
    bk = 0.1 * jax.random.normal(k5, (Ck,), dtype=jnp.float32)
    bv = 0.1 * jax.random.normal(k6, (C,), dtype=jnp.float32)
    # Module initializes gamma = 0 (output == x); use a nonzero deterministic value
    # so the attention path actually contributes in this synthetic check.
    gamma = jnp.float32(0.5)

    out = jax.block_until_ready(
        self_attention_pallas(x, wq, wk, wv, bq, bk, bv, gamma))
    ref = self_attention_ref(x, wq, wk, wv, bq, bk, bv, gamma)

    assert out.shape == (B, C, W, H)
    # bf16 MXU operands (softmax stats + residual kept in f32) -> tolerance vs. pure-f32 ref.
    assert jnp.allclose(out, ref, atol=2e-2, rtol=2e-2), "mismatch vs reference"

    print("KERNEL_OK")
</pallas_src>

<mosaic_0001>
module attributes {stable_mosaic.version = 11 : i64} {
  func.func @self_attention_kernel(%arg0: i32, %arg1: i32, %arg2: memref<1x32x256xf32, #tpu.memory_space<vmem>>, %arg3: memref<40x32xbf16, #tpu.memory_space<vmem>>, %arg4: memref<40x1xf32, #tpu.memory_space<vmem>>, %arg5: memref<1xf32, #tpu.memory_space<smem>>, %arg6: memref<1x32x128xf32, #tpu.memory_space<vmem>>, %arg7: memref<4x256xbf16, #tpu.memory_space<vmem>>, %arg8: memref<4x256xbf16, #tpu.memory_space<vmem>>, %arg9: memref<32x256xbf16, #tpu.memory_space<vmem>>) attributes {dimension_semantics = [#tpu.dimension_semantics<parallel>, #tpu.dimension_semantics<arbitrary>], iteration_bounds = array<i64: 2, 2>, scalar_prefetch = 0 : i64, scratch_operands = 3 : i64, tpu.core_type = #tpu.core_type<tc>, window_params = [{transform_indices = @transform_0, window_bounds = array<i64: 1, 32, 256>}, {pipeline_mode = #tpu.pipeline_mode<synchronous>, transform_indices = @transform_1, window_bounds = array<i64: 40, 32>}, {pipeline_mode = #tpu.pipeline_mode<synchronous>, transform_indices = @transform_2, window_bounds = array<i64: 40, 1>}, {transform_indices = @transform_3, window_bounds = array<i64: 1>}, {transform_indices = @transform_4, window_bounds = array<i64: 1, 32, 128>}]} {
    %c0_i32 = arith.constant 0 : i32
    %0 = arith.cmpi eq, %arg1, %c0_i32 : i32
    %1 = arith.extui %0 : i1 to i32
    %c0_i32_0 = arith.constant 0 : i32
    %2 = arith.cmpi ne, %1, %c0_i32_0 : i32
    scf.if %2 {
      %c0_14 = arith.constant 0 : index
      %c0_15 = arith.constant 0 : index
      %c0_16 = arith.constant 0 : index
      %32 = vector.load %arg2[%c0_14, %c0_15, %c0_16] : memref<1x32x256xf32, #tpu.memory_space<vmem>>, vector<1x32x256xf32>
      %33 = vector.shape_cast %32 : vector<1x32x256xf32> to vector<32x256xf32>
      %34 = arith.truncf %33 : vector<32x256xf32> to vector<32x256xbf16>
      %c0_17 = arith.constant 0 : index
      %c0_18 = arith.constant 0 : index
      %35 = vector.load %arg3[%c0_17, %c0_18] : memref<40x32xbf16, #tpu.memory_space<vmem>>, vector<40x32xbf16>
      %cst_19 = arith.constant dense<0.000000e+00> : vector<40x256xf32>
      %36 = tpu.matmul %35, %34, %cst_19 {dimension_numbers = #tpu.dot_dimension_numbers<[1], [0], [0], [1], [0, 0, 1, 1], [], []>} : vector<40x32xbf16>, vector<32x256xbf16>, vector<40x256xf32> -> vector<40x256xf32>
      %c0_20 = arith.constant 0 : index
      %c0_21 = arith.constant 0 : index
      %37 = vector.load %arg4[%c0_20, %c0_21] : memref<40x1xf32, #tpu.memory_space<vmem>>, vector<40x1xf32>
      %38 = vector.broadcast %37 : vector<40x1xf32> to vector<40x256xf32>
      %39 = arith.addf %36, %38 : vector<40x256xf32>
      %40 = vector.extract_strided_slice %39 {offsets = [0, 0], sizes = [4, 256], strides = [1, 1]} : vector<40x256xf32> to vector<4x256xf32>
      %41 = arith.truncf %40 : vector<4x256xf32> to vector<4x256xbf16>
      %c0_22 = arith.constant 0 : index
      %c0_23 = arith.constant 0 : index
      %42 = vector.load %arg7[%c0_22, %c0_23] : memref<4x256xbf16, #tpu.memory_space<vmem>>, vector<4x256xbf16>
      tpu.vector_store %arg7[%c0_22, %c0_23], %41 {strides = array<i32>} : memref<4x256xbf16, #tpu.memory_space<vmem>>, vector<4x256xbf16>,
      %43 = vector.extract_strided_slice %39 {offsets = [4, 0], sizes = [4, 256], strides = [1, 1]} : vector<40x256xf32> to vector<4x256xf32>
      %44 = arith.truncf %43 : vector<4x256xf32> to vector<4x256xbf16>
      %c0_24 = arith.constant 0 : index
      %c0_25 = arith.constant 0 : index
      %45 = vector.load %arg8[%c0_24, %c0_25] : memref<4x256xbf16, #tpu.memory_space<vmem>>, vector<4x256xbf16>
      tpu.vector_store %arg8[%c0_24, %c0_25], %44 {strides = array<i32>} : memref<4x256xbf16, #tpu.memory_space<vmem>>, vector<4x256xbf16>,
      %46 = vector.extract_strided_slice %39 {offsets = [8, 0], sizes = [32, 256], strides = [1, 1]} : vector<40x256xf32> to vector<32x256xf32>
      %47 = arith.truncf %46 : vector<32x256xf32> to vector<32x256xbf16>
      %c0_26 = arith.constant 0 : index
      %c0_27 = arith.constant 0 : index
      %48 = vector.load %arg9[%c0_26, %c0_27] : memref<32x256xbf16, #tpu.memory_space<vmem>>, vector<32x256xbf16>
      tpu.vector_store %arg9[%c0_26, %c0_27], %47 {strides = array<i32>} : memref<32x256xbf16, #tpu.memory_space<vmem>>, vector<32x256xbf16>,
    } else {
    }
    %c128_i32 = arith.constant 128 : i32
    %3 = arith.muli %arg1, %c128_i32 : i32
    %4 = tpu.assume_multiple %3, 128 : i32
    %c0 = arith.constant 0 : index
    %5 = arith.index_cast %4 : i32 to index
    %6 = vector.load %arg7[%c0, %5] : memref<4x256xbf16, #tpu.memory_space<vmem>>, vector<4x128xbf16>
    %c0_1 = arith.constant 0 : index
    %c0_2 = arith.constant 0 : index
    %7 = vector.load %arg8[%c0_1, %c0_2] : memref<4x256xbf16, #tpu.memory_space<vmem>>, vector<4x256xbf16>
    %cst = arith.constant dense<0.000000e+00> : vector<128x256xf32>
    %8 = tpu.matmul %6, %7, %cst {dimension_numbers = #tpu.dot_dimension_numbers<[0], [0], [1], [1], [0, 1, 1, 1], [], []>} : vector<4x128xbf16>, vector<4x256xbf16>, vector<128x256xf32> -> vector<128x256xf32>
    %cst_3 = arith.constant dense<0xFF800000> : vector<128xf32>
    %9 = vector.multi_reduction <maximumf>, %8, %cst_3 [1] : vector<128x256xf32> to vector<128xf32>
    %10 = vector.shape_cast %9 : vector<128xf32> to vector<128x1xf32>
    %11 = vector.broadcast %10 : vector<128x1xf32> to vector<128x256xf32>
    %12 = arith.subf %8, %11 : vector<128x256xf32>
    %13 = math.exp %12 : vector<128x256xf32>
    %cst_4 = arith.constant dense<0.000000e+00> : vector<128xf32>
    %14 = vector.multi_reduction <add>, %13, %cst_4 [1] : vector<128x256xf32> to vector<128xf32>
    %15 = vector.shape_cast %14 : vector<128xf32> to vector<128x1xf32>
    %16 = tpu.reciprocal %15 {approx = true} : vector<128x1xf32> -> vector<128x1xf32>
    %17 = vector.broadcast %16 : vector<128x1xf32> to vector<128x256xf32>
    %18 = arith.mulf %13, %17 : vector<128x256xf32>
    %c0_5 = arith.constant 0 : index
    %c0_6 = arith.constant 0 : index
    %19 = vector.load %arg9[%c0_5, %c0_6] : memref<32x256xbf16, #tpu.memory_space<vmem>>, vector<32x256xbf16>
    %20 = arith.truncf %18 : vector<128x256xf32> to vector<128x256xbf16>
    %cst_7 = arith.constant dense<0.000000e+00> : vector<32x128xf32>
    %21 = tpu.matmul %19, %20, %cst_7 {dimension_numbers = #tpu.dot_dimension_numbers<[1], [1], [0], [0], [0, 0, 1, 0], [], []>} : vector<32x256xbf16>, vector<128x256xbf16>, vector<32x128xf32> -> vector<32x128xf32>
    %c0_8 = arith.constant 0 : index
    %22 = memref.load %arg5[%c0_8] : memref<1xf32, #tpu.memory_space<smem>>
    %c0_9 = arith.constant 0 : index
    %c0_10 = arith.constant 0 : index
    %23 = arith.index_cast %4 : i32 to index
    %24 = vector.load %arg2[%c0_9, %c0_10, %23] : memref<1x32x256xf32, #tpu.memory_space<vmem>>, vector<1x32x128xf32>
    %25 = vector.shape_cast %24 : vector<1x32x128xf32> to vector<32x128xf32>
    %26 = vector.broadcast %22 : f32 to vector<32x128xf32>
    %27 = arith.mulf %26, %21 : vector<32x128xf32>
    %28 = arith.addf %27, %25 : vector<32x128xf32>
    %c0_11 = arith.constant 0 : index
    %c0_12 = arith.constant 0 : index
    %c0_13 = arith.constant 0 : index
    %29 = vector.load %arg6[%c0_11, %c0_12, %c0_13] : memref<1x32x128xf32, #tpu.memory_space<vmem>>, vector<1x32x128xf32>
    %30 = vector.shape_cast %29 : vector<1x32x128xf32> to vector<32x128xf32>
    %31 = vector.shape_cast %28 : vector<32x128xf32> to vector<1x32x128xf32>
    tpu.vector_store %arg6[%c0_11, %c0_12, %c0_13], %31 {strides = array<i32>} : memref<1x32x128xf32, #tpu.memory_space<vmem>>, vector<1x32x128xf32>,
    return
  }
  func.func @transform_0(%arg0: i32, %arg1: i32) -> (i32, i32, i32) {
    %c0_i32 = arith.constant 0 : i32
    %c0_i32_0 = arith.constant 0 : i32
    %c0_i32_1 = arith.constant 0 : i32
    return %arg0, %c0_i32, %c0_i32_0 : i32, i32, i32
  }
  func.func @transform_1(%arg0: i32, %arg1: i32) -> (i32, i32) {
    %c0_i32 = arith.constant 0 : i32
    %c0_i32_0 = arith.constant 0 : i32
    %c0_i32_1 = arith.constant 0 : i32
    return %c0_i32, %c0_i32_0 : i32, i32
  }
  func.func @transform_2(%arg0: i32, %arg1: i32) -> (i32, i32) {
    %c0_i32 = arith.constant 0 : i32
    %c0_i32_0 = arith.constant 0 : i32
    %c0_i32_1 = arith.constant 0 : i32
    return %c0_i32, %c0_i32_0 : i32, i32
  }
  func.func @transform_3(%arg0: i32, %arg1: i32) -> i32 {
    %c0_i32 = arith.constant 0 : i32
    %c0_i32_0 = arith.constant 0 : i32
    return %c0_i32 : i32
  }
  func.func @transform_4(%arg0: i32, %arg1: i32) -> (i32, i32, i32) {
    %c0_i32 = arith.constant 0 : i32
    %c0_i32_0 = arith.constant 0 : i32
    return %arg0, %c0_i32, %arg1 : i32, i32, i32
  }
}

</mosaic_0001>

<llo_original>
// kernel: tpu_custom_call.1
$region0: #{tpu_custom_call.1}
  #allocation0 [shape = 'u32[]', space=smem, size = 0x4, offset = 0x4, fixed_abs, tag = 'smem constant byte address 0x4 - core index']
  #allocation1 [shape = 'u32[144,128]{1,0:T(1,128)}', space=vmem, size = 0x12000, scoped, tag = 'internal scratch']
  #allocation2 [shape = 'bf16[4,256]{1,0:T(4,128)(2,1)}', space=vmem, size = 0x800, scoped, tag = 'scratch operand']
  #allocation3 [shape = 'bf16[4,256]{1,0:T(4,128)(2,1)}', space=vmem, size = 0x800, scoped, tag = 'scratch operand']
  #allocation4 [shape = 'bf16[32,256]{1,0:T(16,128)(2,1)}', space=vmem, size = 0x4000, scoped, tag = 'scratch operand']
  #allocation5 [shape = 'f32[1]{0:T(128)S(6)}', space=smem, size = 0x200, scoped, tag = 'scoped memory for tpu_custom_call.1']
  %s0 = inlined_call_operand.hbm [shape: f32[2,32,256], index: 0, kind: input, shape index: {}]
  %s1 = inlined_call_operand.vmem [shape: bf16[40,32], index: 1, kind: input, shape index: {}]
  %s2 = inlined_call_operand.vmem [shape: f32[40,1], index: 2, kind: input, shape index: {}]
  %s3 = inlined_call_operand.<no memory space> [shape: f32[1], index: 3, kind: input, shape index: {}]
  %s4 = inlined_call_operand.hbm [shape: f32[2,32,256], index: 4, kind: output, shape index: {}]
  %s5 = sld [smem:[#allocation0]]
  $region57: #{tpu_custom_call.1} parent=0
    _
  %s7 = ssub.s32 1, %s5
  %s8 = scalar_select 0, %s7, %s5
  %9 = sst [smem:[#allocation5]] %s3
  $region1: #{tpu_custom_call.1} parent=0
    #allocation6 [shape = 'u8[65536]{0}', space=vmem, size = 0x10000, scoped, tag = 'input window, operand 0']
    #allocation7 [shape = 's32[2]{0}', space=sflag, size = 0x8, scoped, tag = 'scoped memory for tpu_custom_call.1']
    #allocation8 [shape = 's32[2]{0}', space=sflag, size = 0x8, scoped, tag = 'scoped memory for tpu_custom_call.1']
    #allocation9 [shape = 'u8[32768]{0}', space=vmem, size = 0x8000, scoped, tag = 'output window, operand 0']
    %10 = vsyncpa [#allocation7], 0
    %s11 = scalar_lea.sflag [#allocation7], 1
    %12 = vsyncpa %s11, 0
    %13 = vsyncpa [#allocation8], 0
    %s14 = scalar_lea.sflag [#allocation8], 1
    %15 = vsyncpa %s14, 0
    loop: start=0, step=1, limit=6
    $region2: #{tpu_custom_call.1} parent=1 // loop_pre_header
      _
    $region3: #{tpu_custom_call.1} parent=1 // loop_header
      %s17 = sphi 0, %s21
      %p18 = scmp.ge.s32.totalorder %s17, 6
      %s24 = sphi 0, %s36
      %s25 = sphi 0, %s32
      %s26 = sphi 0, %s24
      %s27 = sphi 0, %s25
      %s28 = sphi 0, %s26
      %s29 = sphi 0, %s27
      %s39 = sphi 0, %s41
      %s42 = sphi 0, %s39
      %s43 = sphi 0, %s42
      %s59 = sphi 0, %s43
      %s63 = sphi 0, %s63
      %s65 = sphi 0, %s63
      %s66 = sphi 0, %s65
      %s80 = sphi 0, %s66
      %s84 = sphi 0, %s84
      %s86 = sphi 0, %s84
      %s87 = sphi 0, %s86
      %s101 = sphi 0, %s87
      %s105 = sphi 0, %s105
      %s107 = sphi 0, %s105
      %s108 = sphi 0, %s107
      %s122 = sphi 0, %s108
      %s130 = sphi 0, %s132
      %s133 = sphi 0, %s130
      %s134 = sphi 0, %s133
      %s150 = sphi 0, %s134
    $region4: #{tpu_custom_call.1} parent=1 // loop_header_branch
      %20 = sbr.rel (%p18) target = $region8
    $region5: #{tpu_custom_call.1} parent=1 // loop_body
      %s22 = ssub.s32 %s17, 1
      %s23 = ssub.s32 %s17, 2
      %s30 = sadd.s32 1, %s25
      %p31 = scmp.ge.s32.totalorder %s30, 2
      %s32 = scalar_select %p31, 0, %s30
      %s33 = sadd.s32 1, %s24
      %s34 = scalar_select %p31, %s33, %s24
      %p35 = scmp.ge.s32.totalorder %s34, 2
      %s36 = scalar_select %p35, 0, %s34
      %s37 = ssub.s32 %s24, %s36
      %p38 = scmp.eq.s32.totalorder %s37, 0
      %s40 = sadd.s32 %s39, 1
      %s41 = scalar_select %p38, %s39, %s40
      %p44 = pneg %p38
      %p45 = scmp.eq.s32.totalorder %s17, 3
      %p46 = por %p44, %p45
      %p47 = scmp.ne.s32.totalorder %s39, %s42
      %p48 = scmp.eq.s32.totalorder %s17, 0
      %p49 = por %p47, %p48
      %p50 = scmp.ne.s32.totalorder %s39, %s42
      %p51 = scmp.eq.s32.totalorder %s22, 3
      %p52 = por %p50, %p51
      %p53 = scmp.ne.s32.totalorder %s42, %s43
      %p54 = scmp.eq.s32.totalorder %s22, 0
      %p55 = por %p53, %p54
      %p56 = scmp.ne.s32.totalorder %s42, %s43
      %p57 = scmp.eq.s32.totalorder %s23, 3
      %p58 = por %p56, %p57
      %p60 = scmp.ne.s32.totalorder %s43, %s59
      %p61 = scmp.eq.s32.totalorder %s23, 0
      %p62 = por %p60, %p61
      %s64 = sadd.s32 %s63, 1
      %p67 = scmp.eq.s32.totalorder %s17, 3
      %p68 = scmp.ne.s32.totalorder %s63, %s65
      %p69 = scmp.eq.s32.totalorder %s17, 0
      %p70 = por %p68, %p69
      %p71 = scmp.ne.s32.totalorder %s63, %s65
      %p72 = scmp.eq.s32.totalorder %s22, 3
      %p73 = por %p71, %p72
      %p74 = scmp.ne.s32.totalorder %s65, %s66
      %p75 = scmp.eq.s32.totalorder %s22, 0
      %p76 = por %p74, %p75
      %p77 = scmp.ne.s32.totalorder %s65, %s66
      %p78 = scmp.eq.s32.totalorder %s23, 3
      %p79 = por %p77, %p78
      %p81 = scmp.ne.s32.totalorder %s66, %s80
      %p82 = scmp.eq.s32.totalorder %s23, 0
      %p83 = por %p81, %p82
      %s85 = sadd.s32 %s84, 1
      %p88 = scmp.eq.s32.totalorder %s17, 3
      %p89 = scmp.ne.s32.totalorder %s84, %s86
      %p90 = scmp.eq.s32.totalorder %s17, 0
      %p91 = por %p89, %p90
      %p92 = scmp.ne.s32.totalorder %s84, %s86
      %p93 = scmp.eq.s32.totalorder %s22, 3
      %p94 = por %p92, %p93
      %p95 = scmp.ne.s32.totalorder %s86, %s87
      %p96 = scmp.eq.s32.totalorder %s22, 0
      %p97 = por %p95, %p96
      %p98 = scmp.ne.s32.totalorder %s86, %s87
      %p99 = scmp.eq.s32.totalorder %s23, 3
      %p100 = por %p98, %p99
      %p102 = scmp.ne.s32.totalorder %s87, %s101
      %p103 = scmp.eq.s32.totalorder %s23, 0
      %p104 = por %p102, %p103
      %s106 = sadd.s32 %s105, 1
      %p109 = scmp.eq.s32.totalorder %s17, 3
      %p110 = scmp.ne.s32.totalorder %s105, %s107
      %p111 = scmp.eq.s32.totalorder %s17, 0
      %p112 = por %p110, %p111
      %p113 = scmp.ne.s32.totalorder %s105, %s107
      %p114 = scmp.eq.s32.totalorder %s22, 3
      %p115 = por %p113, %p114
      %p116 = scmp.ne.s32.totalorder %s107, %s108
      %p117 = scmp.eq.s32.totalorder %s22, 0
      %p118 = por %p116, %p117
      %p119 = scmp.ne.s32.totalorder %s107, %s108
      %p120 = scmp.eq.s32.totalorder %s23, 3
      %p121 = por %p119, %p120
      %p123 = scmp.ne.s32.totalorder %s108, %s122
      %p124 = scmp.eq.s32.totalorder %s23, 0
      %p125 = por %p123, %p124
      %s126 = ssub.s32 %s24, %s36
      %s127 = ssub.s32 %s25, %s32
      %s128 = sor.u32 %s126, %s127
      %p129 = scmp.eq.s32.totalorder %s128, 0
      %s131 = sadd.s32 %s130, 1
      %s132 = scalar_select %p129, %s130, %s131
      %p135 = pneg %p129
      %p136 = scmp.eq.s32.totalorder %s17, 3
      %p137 = por %p135, %p136
      %p138 = scmp.ne.s32.totalorder %s130, %s133
      %p139 = scmp.eq.s32.totalorder %s17, 0
      %p140 = por %p138, %p139
      %p141 = scmp.ne.s32.totalorder %s130, %s133
      %p142 = scmp.eq.s32.totalorder %s22, 3
      %p143 = por %p141, %p142
      %p144 = scmp.ne.s32.totalorder %s133, %s134
      %p145 = scmp.eq.s32.totalorder %s22, 0
      %p146 = por %p144, %p145
      %p147 = scmp.ne.s32.totalorder %s133, %s134
      %p148 = scmp.eq.s32.totalorder %s23, 3
      %p149 = por %p147, %p148
      %p151 = scmp.ne.s32.totalorder %s134, %s150
      %p152 = scmp.eq.s32.totalorder %s23, 0
      %p153 = por %p151, %p152
      %p154 = scmp.le.s32.totalorder 1, %s17
      %p155 = scmp.lt.s32.totalorder %s17, 5
      %p156 = pnand %p154, %p155
      %p157 = pneg %p156
      // Predicated region
      $region9: #{tpu_custom_call.1} parent=5 // pred_check
        _
      $region10: #{tpu_custom_call.1} parent=5 // pred_check_branch
        %159 = sbr.rel (%p156) target = $region12
      $region11: #{tpu_custom_call.1} parent=5 // pred_region
        %s160 = ssub.s32 %s17, 1
        // Predicated region
        $region13: #{tpu_custom_call.1} parent=11 // pred_check
          %p161 = pneg %p76
        $region14: #{tpu_custom_call.1} parent=11 // pred_check_branch
          %163 = sbr.rel (%p161) target = $region16
        $region15: #{tpu_custom_call.1} parent=11 // pred_region
          _
        $region16: #{tpu_custom_call.1} parent=11 // pred_fallthru
          _
        // Predicated region
        $region17: #{tpu_custom_call.1} parent=11 // pred_check
          %p164 = pneg %p97
        $region18: #{tpu_custom_call.1} parent=11 // pred_check_branch
          %166 = sbr.rel (%p164) target = $region20
        $region19: #{tpu_custom_call.1} parent=11 // pred_region
          _
        $region20: #{tpu_custom_call.1} parent=11 // pred_fallthru
          _
        // Predicated region
        $region21: #{tpu_custom_call.1} parent=11 // pred_check
          %p167 = pneg %p118
        $region22: #{tpu_custom_call.1} parent=11 // pred_check_branch
          %169 = sbr.rel (%p167) target = $region24
        $region23: #{tpu_custom_call.1} parent=11 // pred_region
          _
        $region24: #{tpu_custom_call.1} parent=11 // pred_fallthru
          _
      $region12: #{tpu_custom_call.1} parent=5 // pred_fallthru
        _
      %p170 = scmp.lt.s32.totalorder %s17, 4
      // Predicated region
      $region25: #{tpu_custom_call.1} parent=5 // pred_check
        %p171 = pneg %p170
      $region26: #{tpu_custom_call.1} parent=5 // pred_check_branch
        %173 = sbr.rel (%p171) target = $region28
      $region27: #{tpu_custom_call.1} parent=5 // pred_region
        // Predicated region
        $region29: #{tpu_custom_call.1} parent=27 // pred_check
          %p174 = pneg %p49
        $region30: #{tpu_custom_call.1} parent=27 // pred_check_branch
          %176 = sbr.rel (%p174) target = $region32
        $region31: #{tpu_custom_call.1} parent=27 // pred_region
          %s177 = sand.u32 %s39, 1
          %s178 = scalar_lea.sflag [#allocation7], %s177
          %s179 = sand.u32 %s39, 1
          %s180 = smul.addr %s179, 64
          %s181 = scalar_lea.vmem [#allocation6], %s180
          %s183 = ssub.s32 1024, 1024
          %184 = vsyncadd %s178, %s183
          %s185 = smul.addr %s24, 8
          %s186 = smul.addr %s185, 128
          %s187 = scalar_lea.hbm %s0, %s186
          %s188 = sshll.u32 %s181, 4
          %s189 = int_to_ptr.vmem [resolvable:$true] %s188
          %194 = dma.hbm_to_vmem [thread:$0]  %s187, 1024, %s189, %s178, 256, 256, 16
        $region32: #{tpu_custom_call.1} parent=27 // pred_fallthru
          _
      $region28: #{tpu_custom_call.1} parent=5 // pred_fallthru
        _
      %p195 = scmp.le.s32.totalorder 1, %s17
      %p196 = scmp.lt.s32.totalorder %s17, 5
      %p197 = pnand %p195, %p196
      %p198 = pneg %p197
      // Predicated region
      $region33: #{tpu_custom_call.1} parent=5 // pred_check
        _
      $region34: #{tpu_custom_call.1} parent=5 // pred_check_branch
        %200 = sbr.rel (%p197) target = $region36
      $region35: #{tpu_custom_call.1} parent=5 // pred_region
        %s201 = ssub.s32 %s17, 1
        %s202 = sand.u32 %s42, 1
        %s203 = scalar_lea.sflag [#allocation7], %s202
        %s204 = sand.u32 %s42, 1
        %s205 = smul.addr %s204, 64
        %s206 = scalar_lea.vmem [#allocation6], %s205
        // Predicated region
        $region37: #{tpu_custom_call.1} parent=35 // pred_check
          %p207 = pneg %p55
        $region38: #{tpu_custom_call.1} parent=35 // pred_check_branch
          %209 = sbr.rel (%p207) target = $region40
        $region39: #{tpu_custom_call.1} parent=35 // pred_region
          %210 = dma.done %s203, 1024
        $region40: #{tpu_custom_call.1} parent=35 // pred_fallthru
          _
        %s211 = sand.u32 %s42, 1
        %s212 = scalar_lea.sflag [#allocation7], %s211
        %s213 = sand.u32 %s42, 1
        %s214 = smul.addr %s213, 64
        %s215 = scalar_lea.vmem [#allocation6], %s214
        %p216 = pneg %p55
        %p217 = pneg %p52
        %p218 = pneg %p76
        %p219 = pneg %p73
        %p220 = pneg %p97
        %p221 = pneg %p94
        %p222 = pneg %p118
        %p223 = pneg %p115
        %p224 = pneg %p146
        %p225 = pneg %p143
        %s226 = sand.u32 %s133, 1
        %s227 = scalar_lea.sflag [#allocation8], %s226
        %s228 = sand.u32 %s133, 1
        %s229 = smul.addr %s228, 32
        %s230 = scalar_lea.vmem [#allocation9], %s229
        %p232 = scmp.eq.s32.totalorder %s27, 0
        // Predicated region
        $region41: #{tpu_custom_call.1} parent=35 // pred_check
          %p233 = pneg %p232
        $region42: #{tpu_custom_call.1} parent=35 // pred_check_branch
          %235 = sbr.rel (%p233) target = $region44
        $region43: #{tpu_custom_call.1} parent=35 // pred_region
          %v236 = vld [vmem:[%s206] sm:$0xff]
          %v237 = vld [vmem:[%s206 + $0x8] sm:$0xff]
          %v238 = vld [vmem:[%s206 + $0x10] sm:$0xff]
          %v239 = vld [vmem:[%s206 + $0x18] sm:$0xff]
          %v240 = vld [vmem:[%s206 + $0x20] sm:$0xff]
          %v241 = vld [vmem:[%s206 + $0x28] sm:$0xff]
          %v242 = vld [vmem:[%s206 + $0x30] sm:$0xff]
          %v243 = vld [vmem:[%s206 + $0x38] sm:$0xff]
          %v244 = vpack.c.bf16 %v238, %v236
          %v245 = vpack.c.bf16 %v239, %v237
          %v246 = vpack.c.bf16 %v242, %v240
          %v247 = vpack.c.bf16 %v243, %v241
          %v248 = vld [vmem:[%s1] sm:$0xf]
          %v249 = vld [vmem:[%s1 + $0x4] sm:$0xf]
          %v250 = vld [vmem:[%s1 + $0x8] sm:$0xf]
          %v251 = vld [vmem:[%s1 + $0xc] sm:$0xf]
          %v252 = vld [vmem:[%s1 + $0x10] sm:$0xf]
          %v253 = vld [vmem:[%s2] sm:$0xff]
          %v254 = vld [vmem:[%s2 + $0x8] sm:$0xff]
          %v255 = vld [vmem:[%s2 + $0x10] sm:$0xff]
          %v256 = vld [vmem:[%s2 + $0x18] sm:$0xff]
          %v257 = vld [vmem:[%s2 + $0x20] sm:$0xff]
          %259 = vset.pattern.permute.xlu0 0
          %260 = vperm.xlu0 %259, %v253
          %v261 = vpop.permute.xlu0 %260
          %264 = vset.pattern.permute.xlu0 0
          %265 = vperm.xlu0 %264, %v254
          %v266 = vpop.permute.xlu0 %265
          %269 = vset.pattern.permute.xlu0 0
          %270 = vperm.xlu0 %269, %v255
          %v271 = vpop.permute.xlu0 %270
          %274 = vset.pattern.permute.xlu0 0
          %275 = vperm.xlu0 %274, %v256
          %v276 = vpop.permute.xlu0 %275
          %279 = vset.pattern.permute.xlu0 0
          %280 = vperm.xlu0 %279, %v257
          %v281 = vpop.permute.xlu0 %280
          %v288 = vunpack.c.l.b16 %v248
          %v289 = vunpack.c.l.b16 %v249
          %v290 = vunpack.c.l.b16 %v250
          %v291 = vunpack.c.l.b16 %v251
          %v292 = vunpack.c.l.b16 %v252
          %v293 = vpack.c.b16 %v289, %v288
          %v294 = vpack.c.b16 %v291, %v290
          %v295 = vpack.c.b16 %v292, %v292
          %vm296 = vcmask 261120
          %v298 = vsel %vm296, %v293, 0
          %v301 = vsel %vm296, %v294, 0
          %v304 = vsel %vm296, %v295, 0
          %306 = vmatprep.subr.bf16.mxu0 %v245
          %307 = vmatpush1.bf16.msra.mxu0 %v244
          %308 = vmatprep.subr.bf16.mxu0 %v247
          %309 = vmatpush1.bf16.msra.mxu0 %v246
          %310 = vmatprep.subr.bf16.mxu0 0
          %311 = vmatpush1.bf16.msra.mxu0 0
          %312 = vmatprep.subr.bf16.mxu0 0
          %313 = vmatpush1.bf16.msra.mxu0 0
          %314 = vmatprep.subr.bf16.mxu0 0
          %315 = vmatpush1.bf16.msra.mxu0 0
          %316 = vmatprep.subr.bf16.mxu0 0
          %317 = vmatpush1.bf16.msra.mxu0 0
          %318 = vmatprep.subr.bf16.mxu0 0
          %319 = vmatpush1.bf16.msra.mxu0 0
          %320 = vmatprep.subr.bf16.mxu0 0
          %321 = vmatpush1.bf16.msra.mxu0 0
          %322 = vmatprep.subr.bf16.mxu0 0
          %323 = vmatpush1.bf16.msra.mxu0 0
          %324 = vmatprep.subr.bf16.mxu0 0
          %325 = vmatpush1.bf16.msra.mxu0 0
          %326 = vmatprep.subr.bf16.mxu0 0
          %327 = vmatpush1.bf16.msra.mxu0 0
          %328 = vmatprep.subr.bf16.mxu0 0
          %329 = vmatpush1.bf16.msra.mxu0 0
          %330 = vmatprep.subr.bf16.mxu0 0
          %331 = vmatpush1.bf16.msra.mxu0 0
          %332 = vmatprep.subr.bf16.mxu0 0
          %333 = vmatpush1.bf16.msra.mxu0 0
          %334 = vmatprep.subr.bf16.mxu0 0
          %335 = vmatpush1.bf16.msra.mxu0 0
          %336 = vmatprep.subr.bf16.mxu0 0
          %337 = vmatpush1.bf16.msra.mxu0 0
          %338 = vmatprep.mubr.bf16.mxu0 0
          %339 = vmatmul.mubr.bf16.gmra.mrb[0].mxu0 %v298
          %v340 = vpop.f32.mrb[0].mxu0
          %v341 = vadd.f32 %v261, %v340
          %v342 = vpop.f32.mrb[0].mxu0
          %v343 = vadd.f32 %v261, %v342
          %v344 = vpop.f32.mrb[0].mxu0
          %v345 = vadd.f32 %v266, %v344
          %v346 = vpop.f32.mrb[0].mxu0
          %v347 = vadd.f32 %v266, %v346
          %348 = vmatprep.mubr.bf16.mxu0 0
          %349 = vmatmul.mubr.bf16.gmra.mrb[0].mxu0 %v301
          %v350 = vpop.f32.mrb[0].mxu0
          %v351 = vadd.f32 %v271, %v350
          %v352 = vpop.f32.mrb[0].mxu0
          %v353 = vadd.f32 %v271, %v352
          %v354 = vpop.f32.mrb[0].mxu0
          %v355 = vadd.f32 %v276, %v354
          %v356 = vpop.f32.mrb[0].mxu0
          %v357 = vadd.f32 %v276, %v356
          %358 = vmatprep.mubr.bf16.mxu0 0
          %359 = vmatmul.mubr.bf16.gmra.mrb[0].mxu0 %v304
          %v360 = vpop.f32.mrb[0].mxu0
          %v361 = vadd.f32 %v281, %v360
          %v362 = vpop.f32.mrb[0].mxu0
          %v363 = vadd.f32 %v281, %v362
          %v364 = vpop.f32.mrb[0].mxu0
          %v365 = vpop.f32.mrb[0].mxu0
          %366 = vdwg.mxu0
          %v367 = vpack.c.bf16 %v341, %v341
          %v368 = vpack.c.bf16 %v343, %v343
          %v371 = vcombine.low %v367, %v368
          %v373 = vunpack.c.l.s4 1983009808
          %v374 = vunpack.c.0.s8 %v373
          %v375 = vlaneseq
          %v376 = vshrl.u32 %v375, 7
          %v377 = vsub.s32 %v374, %v376
          %v378 = vrot.slane %v371, %v377
          %380 = vst [vmem:[#allocation2] sm:$0xf] %v378
          %v381 = vcombine.high %v378, %v378
          %383 = vst [vmem:[#allocation3] sm:$0xf] %v381
          %v384 = vpack.c.bf16 %v351, %v345
          %v385 = vpack.c.bf16 %v353, %v347
          %v386 = vpack.c.bf16 %v361, %v355
          %v387 = vpack.c.bf16 %v363, %v357
          %388 = vst [vmem:[#allocation4] sm:$0xff] %v384
          %389 = vst [vmem:[#allocation4 + $0x8] sm:$0xff] %v385
          %390 = vst [vmem:[#allocation4 + $0x10] sm:$0xff] %v386
          %391 = vst [vmem:[#allocation4 + $0x18] sm:$0xff] %v387
        $region44: #{tpu_custom_call.1} parent=35 // pred_fallthru
          _
        %s392 = smul.u32 %s27, 128
        %s393 = sshra.s32 %s392, 7
        %s394 = sand.u32 %s392, 127
        %s395 = smul.addr %s393, 2
        %s396 = scalar_lea.vmem [#allocation2], %s395
        %v397 = vld [vmem:[%s396] sm:$0x3]
        %v398 = vld [vmem:[#allocation3] sm:$0xf]
        %399 = vxpose.xlu0.c.b16.start [1/8] %v397, 128
        %400 = vxpose.xlu0.c.b16.cont [2/8] 0, 128
        %401 = vxpose.xlu0.c.b16.cont [3/8] 0, 128
        %402 = vxpose.xlu0.c.b16.cont [4/8] 0, 128
        %403 = vxpose.xlu0.c.b16.cont [5/8] 0, 128
        %404 = vxpose.xlu0.c.b16.cont [6/8] 0, 128
        %405 = vxpose.xlu0.c.b16.cont [7/8] 0, 128
        %406 = vxpose.xlu0.c.b16.end [8/8] 0, 128
        %v407 = vpop.trf.xlu0
        %v408 = vpop.trf.xlu0
        %v409 = vpop.trf.xlu0
        %v410 = vpop.trf.xlu0
        %v411 = vpop.trf.xlu0
        %v412 = vpop.trf.xlu0
        %v413 = vpop.trf.xlu0
        %v414 = vpop.trf.xlu0
        %v417 = vunpack.c.l.s4 1983009808
        %v418 = vunpack.c.0.s8 %v417
        %v419 = vlaneseq
        %v420 = vshrl.u32 %v419, 7
        %v421 = vsub.s32 %v418, %v420
        %v422 = vrot.slane %v398, %v421
        %v423 = vcombine.high %v422, %v422
        %vm424 = vcmask 31744
        %v426 = vsel %vm424, %v407, 0
        %v429 = vsel %vm424, %v408, 0
        %v432 = vsel %vm424, %v409, 0
        %v435 = vsel %vm424, %v410, 0
        %v438 = vsel %vm424, %v411, 0
        %v441 = vsel %vm424, %v412, 0
        %v444 = vsel %vm424, %v413, 0
        %v447 = vsel %vm424, %v414, 0
        %vm449 = vcmask 1041408
        %v451 = vsel %vm449, %v422, 0
        %v454 = vsel %vm449, %v423, 0
        %456 = vmatprep.subr.bf16.mxu0 %v454
        %457 = vmatpush1.bf16.msra.mxu0 %v451
        %458 = vmatprep.subr.bf16.mxu0 0
        %459 = vmatpush1.bf16.msra.mxu0 0
        %460 = vmatprep.subr.bf16.mxu0 0
        %461 = vmatpush1.bf16.msra.mxu0 0
        %462 = vmatprep.subr.bf16.mxu0 0
        %463 = vmatpush1.bf16.msra.mxu0 0
        %464 = vmatprep.subr.bf16.mxu0 0
        %465 = vmatpush1.bf16.msra.mxu0 0
        %466 = vmatprep.subr.bf16.mxu0 0
        %467 = vmatpush1.bf16.msra.mxu0 0
        %468 = vmatprep.subr.bf16.mxu0 0
        %469 = vmatpush1.bf16.msra.mxu0 0
        %470 = vmatprep.subr.bf16.mxu0 0
        %471 = vmatpush1.bf16.msra.mxu0 0
        %472 = vmatprep.subr.bf16.mxu0 0
        %473 = vmatpush1.bf16.msra.mxu0 0
        %474 = vmatprep.subr.bf16.mxu0 0
        %475 = vmatpush1.bf16.msra.mxu0 0
        %476 = vmatprep.subr.bf16.mxu0 0
        %477 = vmatpush1.bf16.msra.mxu0 0
        %478 = vmatprep.subr.bf16.mxu0 0
        %479 = vmatpush1.bf16.msra.mxu0 0
        %480 = vmatprep.subr.bf16.mxu0 0
        %481 = vmatpush1.bf16.msra.mxu0 0
        %482 = vmatprep.subr.bf16.mxu0 0
        %483 = vmatpush1.bf16.msra.mxu0 0
        %484 = vmatprep.subr.bf16.mxu0 0
        %485 = vmatpush1.bf16.msra.mxu0 0
        %486 = vmatprep.subr.bf16.mxu0 0
        %487 = vmatpush1.bf16.msra.mxu0 0
        %488 = vmatprep.mubr.bf16.mxu0 0
        %489 = vmatmul.mubr.bf16.gmra.mrb[0].mxu0 %v426
        %v490 = vpop.f32.mrb[0].mxu0
        %v491 = vadd.f32 0.0, %v490
        %v492 = vpop.f32.mrb[0].mxu0
        %v493 = vadd.f32 0.0, %v492
        %v494 = vpop.f32.mrb[0].mxu0
        %v495 = vadd.f32 0.0, %v494
        %v496 = vpop.f32.mrb[0].mxu0
        %v497 = vadd.f32 0.0, %v496
        %498 = vmatprep.mubr.bf16.mxu0 0
        %499 = vmatmul.mubr.bf16.gmra.mrb[0].mxu0 %v429
        %v500 = vpop.f32.mrb[0].mxu0
        %v501 = vadd.f32 0.0, %v500
        %v502 = vpop.f32.mrb[0].mxu0
        %v503 = vadd.f32 0.0, %v502
        %v504 = vpop.f32.mrb[0].mxu0
        %v505 = vadd.f32 0.0, %v504
        %v506 = vpop.f32.mrb[0].mxu0
        %v507 = vadd.f32 0.0, %v506
        %508 = vmatprep.mubr.bf16.mxu0 0
        %509 = vmatmul.mubr.bf16.gmra.mrb[0].mxu0 %v432
        %v510 = vpop.f32.mrb[0].mxu0
        %v511 = vadd.f32 0.0, %v510
        %v512 = vpop.f32.mrb[0].mxu0
        %v513 = vadd.f32 0.0, %v512
        %v514 = vpop.f32.mrb[0].mxu0
        %v515 = vadd.f32 0.0, %v514
        %v516 = vpop.f32.mrb[0].mxu0
        %v517 = vadd.f32 0.0, %v516
        %518 = vmatprep.mubr.bf16.mxu0 0
        %519 = vmatmul.mubr.bf16.gmra.mrb[0].mxu0 %v435
        %v520 = vpop.f32.mrb[0].mxu0
        %v521 = vadd.f32 0.0, %v520
        %v522 = vpop.f32.mrb[0].mxu0
        %v523 = vadd.f32 0.0, %v522
        %v524 = vpop.f32.mrb[0].mxu0
        %v525 = vadd.f32 0.0, %v524
        %v526 = vpop.f32.mrb[0].mxu0
        %v527 = vadd.f32 0.0, %v526
        %528 = vmatprep.mubr.bf16.mxu0 0
        %529 = vmatmul.mubr.bf16.gmra.mrb[0].mxu0 %v438
        %v530 = vpop.f32.mrb[0].mxu0
        %v531 = vadd.f32 0.0, %v530
        %v532 = vpop.f32.mrb[0].mxu0
        %v533 = vadd.f32 0.0, %v532
        %v534 = vpop.f32.mrb[0].mxu0
        %v535 = vadd.f32 0.0, %v534
        %v536 = vpop.f32.mrb[0].mxu0
        %v537 = vadd.f32 0.0, %v536
        %538 = vmatprep.mubr.bf16.mxu0 0
        %539 = vmatmul.mubr.bf16.gmra.mrb[0].mxu0 %v441
        %v540 = vpop.f32.mrb[0].mxu0
        %v541 = vadd.f32 0.0, %v540
        %v542 = vpop.f32.mrb[0].mxu0
        %v543 = vadd.f32 0.0, %v542
        %v544 = vpop.f32.mrb[0].mxu0
        %v545 = vadd.f32 0.0, %v544
        %v546 = vpop.f32.mrb[0].mxu0
        %v547 = vadd.f32 0.0, %v546
        %548 = vmatprep.mubr.bf16.mxu0 0
        %549 = vmatmul.mubr.bf16.gmra.mrb[0].mxu0 %v444
        %v550 = vpop.f32.mrb[0].mxu0
        %v551 = vadd.f32 0.0, %v550
        %v552 = vpop.f32.mrb[0].mxu0
        %v553 = vadd.f32 0.0, %v552
        %v554 = vpop.f32.mrb[0].mxu0
        %v555 = vadd.f32 0.0, %v554
        %v556 = vpop.f32.mrb[0].mxu0
        %v557 = vadd.f32 0.0, %v556
        %558 = vmatprep.mubr.bf16.mxu0 0
        %559 = vmatmul.mubr.bf16.gmra.mrb[0].mxu0 %v447
        %v560 = vpop.f32.mrb[0].mxu0
        %v561 = vadd.f32 0.0, %v560
        %v562 = vpop.f32.mrb[0].mxu0
        %v563 = vadd.f32 0.0, %v562
        %v564 = vpop.f32.mrb[0].mxu0
        %v565 = vadd.f32 0.0, %v564
        %v566 = vpop.f32.mrb[0].mxu0
        %v567 = vadd.f32 0.0, %v566
        %568 = vdwg.mxu0
        %v569 = vmax.f32 %v491, %v493
        %570 = vmax.xlane.f32.xlu0 %v569
        %v571 = vpop.xlane.xlu0 %570
        %v572 = vmax.f32 %v495, %v497
        %573 = vmax.xlane.f32.xlu0 %v572
        %v574 = vpop.xlane.xlu0 %573
        %v575 = vmax.f32 %v501, %v503
        %576 = vmax.xlane.f32.xlu0 %v575
        %v577 = vpop.xlane.xlu0 %576
        %v578 = vmax.f32 %v505, %v507
        %579 = vmax.xlane.f32.xlu0 %v578
        %v580 = vpop.xlane.xlu0 %579
        %v581 = vmax.f32 %v511, %v513
        %582 = vmax.xlane.f32.xlu0 %v581
        %v583 = vpop.xlane.xlu0 %582
        %v584 = vmax.f32 %v515, %v517
        %585 = vmax.xlane.f32.xlu0 %v584
        %v586 = vpop.xlane.xlu0 %585
        %v587 = vmax.f32 %v521, %v523
        %588 = vmax.xlane.f32.xlu0 %v587
        %v589 = vpop.xlane.xlu0 %588
        %v590 = vmax.f32 %v525, %v527
        %591 = vmax.xlane.f32.xlu0 %v590
        %v592 = vpop.xlane.xlu0 %591
        %v593 = vmax.f32 %v531, %v533
        %594 = vmax.xlane.f32.xlu0 %v593
        %v595 = vpop.xlane.xlu0 %594
        %v596 = vmax.f32 %v535, %v537
        %597 = vmax.xlane.f32.xlu0 %v596
        %v598 = vpop.xlane.xlu0 %597
        %v599 = vmax.f32 %v541, %v543
        %600 = vmax.xlane.f32.xlu0 %v599
        %v601 = vpop.xlane.xlu0 %600
        %v602 = vmax.f32 %v545, %v547
        %603 = vmax.xlane.f32.xlu0 %v602
        %v604 = vpop.xlane.xlu0 %603
        %v605 = vmax.f32 %v551, %v553
        %606 = vmax.xlane.f32.xlu0 %v605
        %v607 = vpop.xlane.xlu0 %606
        %v608 = vmax.f32 %v555, %v557
        %609 = vmax.xlane.f32.xlu0 %v608
        %v610 = vpop.xlane.xlu0 %609
        %v611 = vmax.f32 %v561, %v563
        %612 = vmax.xlane.f32.xlu0 %v611
        %v613 = vpop.xlane.xlu0 %612
        %v614 = vmax.f32 %v565, %v567
        %615 = vmax.xlane.f32.xlu0 %v614
        %v616 = vpop.xlane.xlu0 %615
        %v617 = vsub.f32 %v491, %v571
        %v618 = vsub.f32 %v493, %v571
        %v619 = vsub.f32 %v495, %v574
        %v620 = vsub.f32 %v497, %v574
        %v621 = vsub.f32 %v501, %v577
        %v622 = vsub.f32 %v503, %v577
        %v623 = vsub.f32 %v505, %v580
        %v624 = vsub.f32 %v507, %v580
        %v625 = vsub.f32 %v511, %v583
        %v626 = vsub.f32 %v513, %v583
        %v627 = vsub.f32 %v515, %v586
        %v628 = vsub.f32 %v517, %v586
        %v629 = vsub.f32 %v521, %v589
        %v630 = vsub.f32 %v523, %v589
        %v631 = vsub.f32 %v525, %v592
        %v632 = vsub.f32 %v527, %v592
        %v633 = vsub.f32 %v531, %v595
        %v634 = vsub.f32 %v533, %v595
        %v635 = vsub.f32 %v535, %v598
        %v636 = vsub.f32 %v537, %v598
        %v637 = vsub.f32 %v541, %v601
        %v638 = vsub.f32 %v543, %v601
        %v639 = vsub.f32 %v545, %v604
        %v640 = vsub.f32 %v547, %v604
        %v641 = vsub.f32 %v551, %v607
        %v642 = vsub.f32 %v553, %v607
        %v643 = vsub.f32 %v555, %v610
        %v644 = vsub.f32 %v557, %v610
        %v645 = vsub.f32 %v561, %v613
        %v646 = vsub.f32 %v563, %v613
        %v647 = vsub.f32 %v565, %v616
        %v648 = vsub.f32 %v567, %v616
        %v649 = vmul.f32 %v617, 1.442695
        %v650 = vpow.pop %v649
        %v651 = vmul.f32 %v618, 1.442695
        %v652 = vpow.pop %v651
        %v653 = vmul.f32 %v619, 1.442695
        %v654 = vpow.pop %v653
        %v655 = vmul.f32 %v620, 1.442695
        %v656 = vpow.pop %v655
        %v657 = vmul.f32 %v621, 1.442695
        %v658 = vpow.pop %v657
        %v659 = vmul.f32 %v622, 1.442695
        %v660 = vpow.pop %v659
        %v661 = vmul.f32 %v623, 1.442695
        %v662 = vpow.pop %v661
        %v663 = vmul.f32 %v624, 1.442695
        %v664 = vpow.pop %v663
        %v665 = vmul.f32 %v625, 1.442695
        %v666 = vpow.pop %v665
        %v667 = vmul.f32 %v626, 1.442695
        %v668 = vpow.pop %v667
        %v669 = vmul.f32 %v627, 1.442695
        %v670 = vpow.pop %v669
        %v671 = vmul.f32 %v628, 1.442695
        %v672 = vpow.pop %v671
        %v673 = vmul.f32 %v629, 1.442695
        %v674 = vpow.pop %v673
        %v675 = vmul.f32 %v630, 1.442695
        %v676 = vpow.pop %v675
        %v677 = vmul.f32 %v631, 1.442695
        %v678 = vpow.pop %v677
        %v679 = vmul.f32 %v632, 1.442695
        %v680 = vpow.pop %v679
        %v681 = vmul.f32 %v633, 1.442695
        %v682 = vpow.pop %v681
        %v683 = vmul.f32 %v634, 1.442695
        %v684 = vpow.pop %v683
        %v685 = vmul.f32 %v635, 1.442695
        %v686 = vpow.pop %v685
        %v687 = vmul.f32 %v636, 1.442695
        %v688 = vpow.pop %v687
        %v689 = vmul.f32 %v637, 1.442695
        %v690 = vpow.pop %v689
        %v691 = vmul.f32 %v638, 1.442695
        %v692 = vpow.pop %v691
        %v693 = vmul.f32 %v639, 1.442695
        %v694 = vpow.pop %v693
        %v695 = vmul.f32 %v640, 1.442695
        %v696 = vpow.pop %v695
        %v697 = vmul.f32 %v641, 1.442695
        %v698 = vpow.pop %v697
        %v699 = vmul.f32 %v642, 1.442695
        %v700 = vpow.pop %v699
        %v701 = vmul.f32 %v643, 1.442695
        %v702 = vpow.pop %v701
        %v703 = vmul.f32 %v644, 1.442695
        %v704 = vpow.pop %v703
        %v705 = vmul.f32 %v645, 1.442695
        %v706 = vpow.pop %v705
        %v707 = vmul.f32 %v646, 1.442695
        %v708 = vpow.pop %v707
        %v709 = vmul.f32 %v647, 1.442695
        %v710 = vpow.pop %v709
        %v711 = vmul.f32 %v648, 1.442695
        %v712 = vpow.pop %v711
        %v713 = vadd.f32 %v650, %v652
        %714 = vadd.xlane.f32.xlu0 %v713
        %v715 = vpop.xlane.xlu0 %714
        %v716 = vadd.f32 %v654, %v656
        %717 = vadd.xlane.f32.xlu0 %v716
        %v718 = vpop.xlane.xlu0 %717
        %v719 = vadd.f32 %v658, %v660
        %720 = vadd.xlane.f32.xlu0 %v719
        %v721 = vpop.xlane.xlu0 %720
        %v722 = vadd.f32 %v662, %v664
        %723 = vadd.xlane.f32.xlu0 %v722
        %v724 = vpop.xlane.xlu0 %723
        %v725 = vadd.f32 %v666, %v668
        %726 = vadd.xlane.f32.xlu0 %v725
        %v727 = vpop.xlane.xlu0 %726
        %v728 = vadd.f32 %v670, %v672
        %729 = vadd.xlane.f32.xlu0 %v728
        %v730 = vpop.xlane.xlu0 %729
        %v731 = vadd.f32 %v674, %v676
        %732 = vadd.xlane.f32.xlu0 %v731
        %v733 = vpop.xlane.xlu0 %732
        %v734 = vadd.f32 %v678, %v680
        %735 = vadd.xlane.f32.xlu0 %v734
        %v736 = vpop.xlane.xlu0 %735
        %v737 = vadd.f32 %v682, %v684
        %738 = vadd.xlane.f32.xlu0 %v737
        %v739 = vpop.xlane.xlu0 %738
        %v740 = vadd.f32 %v686, %v688
        %741 = vadd.xlane.f32.xlu0 %v740
        %v742 = vpop.xlane.xlu0 %741
        %v743 = vadd.f32 %v690, %v692
        %744 = vadd.xlane.f32.xlu0 %v743
        %v745 = vpop.xlane.xlu0 %744
        %v746 = vadd.f32 %v694, %v696
        %747 = vadd.xlane.f32.xlu0 %v746
        %v748 = vpop.xlane.xlu0 %747
        %v749 = vadd.f32 %v698, %v700
        %750 = vadd.xlane.f32.xlu0 %v749
        %v751 = vpop.xlane.xlu0 %750
        %v752 = vadd.f32 %v702, %v704
        %753 = vadd.xlane.f32.xlu0 %v752
        %v754 = vpop.xlane.xlu0 %753
        %v755 = vadd.f32 %v706, %v708
        %756 = vadd.xlane.f32.xlu0 %v755
        %v757 = vpop.xlane.xlu0 %756
        %v758 = vadd.f32 %v710, %v712
        %759 = vadd.xlane.f32.xlu0 %v758
        %v760 = vpop.xlane.xlu0 %759
        %v761 = vrcp.pop %v715
        %v762 = vrcp.pop %v718
        %v763 = vrcp.pop %v721
        %v764 = vrcp.pop %v724
        %v765 = vrcp.pop %v727
        %v766 = vrcp.pop %v730
        %v767 = vrcp.pop %v733
        %v768 = vrcp.pop %v736
        %v769 = vrcp.pop %v739
        %v770 = vrcp.pop %v742
        %v771 = vrcp.pop %v745
        %v772 = vrcp.pop %v748
        %v773 = vrcp.pop %v751
        %v774 = vrcp.pop %v754
        %v775 = vrcp.pop %v757
        %v776 = vrcp.pop %v760
        %v777 = vmul.f32 %v650, %v761
        %v778 = vmul.f32 %v652, %v761
        %v779 = vmul.f32 %v654, %v762
        %v780 = vmul.f32 %v656, %v762
        %v781 = vmul.f32 %v658, %v763
        %v782 = vmul.f32 %v660, %v763
        %v783 = vmul.f32 %v662, %v764
        %v784 = vmul.f32 %v664, %v764
        %v785 = vmul.f32 %v666, %v765
        %v786 = vmul.f32 %v668, %v765
        %v787 = vmul.f32 %v670, %v766
        %v788 = vmul.f32 %v672, %v766
        %v789 = vmul.f32 %v674, %v767
        %v790 = vmul.f32 %v676, %v767
        %v791 = vmul.f32 %v678, %v768
        %v792 = vmul.f32 %v680, %v768
        %v793 = vmul.f32 %v682, %v769
        %v794 = vmul.f32 %v684, %v769
        %v795 = vmul.f32 %v686, %v770
        %v796 = vmul.f32 %v688, %v770
        %v797 = vmul.f32 %v690, %v771
        %v798 = vmul.f32 %v692, %v771
        %v799 = vmul.f32 %v694, %v772
        %v800 = vmul.f32 %v696, %v772
        %v801 = vmul.f32 %v698, %v773
        %v802 = vmul.f32 %v700, %v773
        %v803 = vmul.f32 %v702, %v774
        %v804 = vmul.f32 %v704, %v774
        %v805 = vmul.f32 %v706, %v775
        %v806 = vmul.f32 %v708, %v775
        %v807 = vmul.f32 %v710, %v776
        %v808 = vmul.f32 %v712, %v776
        %v809 = vld [vmem:[#allocation4] sm:$0xff]
        %v810 = vld [vmem:[#allocation4 + $0x8] sm:$0xff]
        %v811 = vld [vmem:[#allocation4 + $0x10] sm:$0xff]
        %v812 = vld [vmem:[#allocation4 + $0x18] sm:$0xff]
        %v813 = vpack.c.bf16 %v779, %v777
        %v814 = vpack.c.bf16 %v780, %v778
        %v815 = vpack.c.bf16 %v783, %v781
        %v816 = vpack.c.bf16 %v784, %v782
        %v817 = vpack.c.bf16 %v787, %v785
        %v818 = vpack.c.bf16 %v788, %v786
        %v819 = vpack.c.bf16 %v791, %v789
        %v820 = vpack.c.bf16 %v792, %v790
        %v821 = vpack.c.bf16 %v795, %v793
        %v822 = vpack.c.bf16 %v796, %v794
        %v823 = vpack.c.bf16 %v799, %v797
        %v824 = vpack.c.bf16 %v800, %v798
        %v825 = vpack.c.bf16 %v803, %v801
        %v826 = vpack.c.bf16 %v804, %v802
        %v827 = vpack.c.bf16 %v807, %v805
        %v828 = vpack.c.bf16 %v808, %v806
        %829 = vmatprep.subr.bf16.mxu0 %v814
        %830 = vmatpush1.bf16.xpose.msra.mxu0 %v813
        %831 = vmatprep.subr.bf16.mxu0 %v816
        %832 = vmatpush1.bf16.xpose.msra.mxu0 %v815
        %833 = vmatprep.subr.bf16.mxu0 %v818
        %834 = vmatpush1.bf16.xpose.msra.mxu0 %v817
        %835 = vmatprep.subr.bf16.mxu0 %v820
        %836 = vmatpush1.bf16.xpose.msra.mxu0 %v819
        %837 = vmatprep.subr.bf16.mxu0 %v822
        %838 = vmatpush1.bf16.xpose.msra.mxu0 %v821
        %839 = vmatprep.subr.bf16.mxu0 %v824
        %840 = vmatpush1.bf16.xpose.msra.mxu0 %v823
        %841 = vmatprep.subr.bf16.mxu0 %v826
        %842 = vmatpush1.bf16.xpose.msra.mxu0 %v825
        %843 = vmatprep.subr.bf16.mxu0 %v828
        %844 = vmatpush1.bf16.xpose.msra.mxu0 %v827
        %845 = vmatprep.subr.bf16.mxu0 0
        %846 = vmatpush1.bf16.xpose.msra.mxu0 0
        %847 = vmatprep.subr.bf16.mxu0 0
        %848 = vmatpush1.bf16.xpose.msra.mxu0 0
        %849 = vmatprep.subr.bf16.mxu0 0
        %850 = vmatpush1.bf16.xpose.msra.mxu0 0
        %851 = vmatprep.subr.bf16.mxu0 0
        %852 = vmatpush1.bf16.xpose.msra.mxu0 0
        %853 = vmatprep.subr.bf16.mxu0 0
        %854 = vmatpush1.bf16.xpose.msra.mxu0 0
        %855 = vmatprep.subr.bf16.mxu0 0
        %856 = vmatpush1.bf16.xpose.msra.mxu0 0
        %857 = vmatprep.subr.bf16.mxu0 0
        %858 = vmatpush1.bf16.xpose.msra.mxu0 0
        %859 = vmatprep.subr.bf16.mxu0 0
        %860 = vmatpush1.bf16.xpose.msra.mxu0 0
        %861 = vmatprep.mubr.bf16.mxu0 %v810
        %862 = vmatmul.mubr.bf16.gmra.mrb[0].mxu0 %v809
        %v863 = vpop.f32.mrb[0].mxu0
        %v864 = vadd.f32 0.0, %v863
        %v865 = vpop.f32.mrb[0].mxu0
        %v866 = vpop.f32.mrb[0].mxu0
        %v867 = vadd.f32 0.0, %v866
        %v868 = vpop.f32.mrb[0].mxu0
        %869 = vmatprep.mubr.bf16.mxu0 %v812
        %870 = vmatmul.mubr.bf16.gmra.mrb[0].mxu0 %v811
        %v871 = vpop.f32.mrb[0].mxu0
        %v872 = vadd.f32 0.0, %v871
        %v873 = vpop.f32.mrb[0].mxu0
        %v874 = vpop.f32.mrb[0].mxu0
        %v875 = vadd.f32 0.0, %v874
        %v876 = vpop.f32.mrb[0].mxu0
        %877 = vdwg.mxu0
        %s878 = sld [smem:[#allocation5]]
        %s879 = smul.addr %s393, 8
        %s880 = scalar_lea.vmem %s206, %s879 [#allocation6]
        %v881 = vld [vmem:[%s880] sm:$0xff]
        %v882 = vld [vmem:[%s880 + $0x10] sm:$0xff]
        %v883 = vld [vmem:[%s880 + $0x20] sm:$0xff]
        %v884 = vld [vmem:[%s880 + $0x30] sm:$0xff]
        %v885 = vstv %s878
        %v886 = vmul.f32 %v885, %v864
        %v887 = vmul.f32 %v885, %v867
        %v888 = vmul.f32 %v885, %v872
        %v889 = vmul.f32 %v885, %v875
        %v890 = vadd.f32 %v886, %v881
        %v891 = vadd.f32 %v887, %v882
        %v892 = vadd.f32 %v888, %v883
        %v893 = vadd.f32 %v889, %v884
        %894 = vst [vmem:[%s230] sm:$0xff] %v890
        %895 = vst [vmem:[%s230 + $0x8] sm:$0xff] %v891
        %896 = vst [vmem:[%s230 + $0x10] sm:$0xff] %v892
        %897 = vst [vmem:[%s230 + $0x18] sm:$0xff] %v893
        %s898 = sand.u32 %s133, 1
        %s899 = scalar_lea.sflag [#allocation8], %s898
        %s900 = sand.u32 %s133, 1
        %s901 = smul.addr %s900, 32
        %s902 = scalar_lea.vmem [#allocation9], %s901
        // Predicated region
        $region45: #{tpu_custom_call.1} parent=35 // pred_check
          %p903 = pneg %p143
        $region46: #{tpu_custom_call.1} parent=35 // pred_check_branch
          %905 = sbr.rel (%p903) target = $region48
        $region47: #{tpu_custom_call.1} parent=35 // pred_region
          %s907 = ssub.s32 512, 512
          %908 = vsyncadd %s899, %s907
          %s909 = smul.addr %s26, 8
          %s910 = sadd.s32 %s27, %s909
          %s911 = smul.addr %s910, 128
          %s912 = scalar_lea.hbm %s4, %s911
          %s913 = sshll.u32 %s902, 4
          %s914 = int_to_ptr.vmem [resolvable:$true] %s913
          %919 = dma.vmem_to_hbm [thread:$0]  %s914, 512, %s912, %s899, 128, 256, 8
        $region48: #{tpu_custom_call.1} parent=35 // pred_fallthru
          _
      $region36: #{tpu_custom_call.1} parent=5 // pred_fallthru
        _
      %p920 = scmp.le.s32.totalorder 2, %s17
      // Predicated region
      $region49: #{tpu_custom_call.1} parent=5 // pred_check
        %p921 = pneg %p920
      $region50: #{tpu_custom_call.1} parent=5 // pred_check_branch
        %923 = sbr.rel (%p921) target = $region52
      $region51: #{tpu_custom_call.1} parent=5 // pred_region
        %s924 = ssub.s32 %s17, 2
        // Predicated region
        $region53: #{tpu_custom_call.1} parent=51 // pred_check
          %p925 = pneg %p149
        $region54: #{tpu_custom_call.1} parent=51 // pred_check_branch
          %927 = sbr.rel (%p925) target = $region56
        $region55: #{tpu_custom_call.1} parent=51 // pred_region
          %s928 = sand.u32 %s134, 1
          %s929 = scalar_lea.sflag [#allocation8], %s928
          %s930 = sand.u32 %s134, 1
          %s931 = smul.addr %s930, 32
          %s932 = scalar_lea.vmem [#allocation9], %s931
          %933 = dma.done %s929, 512
        $region56: #{tpu_custom_call.1} parent=51 // pred_fallthru
          _
      $region52: #{tpu_custom_call.1} parent=5 // pred_fallthru
        _
    $region6: #{tpu_custom_call.1} parent=1 // loop_footer
      %s21 = sadd.s32 1, %s17
    $region7: #{tpu_custom_call.1} parent=1 // loop_footer_branch
      %16 = sbr.rel target = $region3
    $region8: #{tpu_custom_call.1} parent=1 // loop_exit
      _
    %934 = vsyncpa [#allocation7], 1
    %s935 = scalar_lea.sflag [#allocation7], 1
    %936 = vsyncpa %s935, 1
    %937 = vsyncpa [#allocation8], 1
    %s938 = scalar_lea.sflag [#allocation8], 1
    %939 = vsyncpa %s938, 1

</llo_original>
